<compile_context>
chip_gen: v6e
topology: v6e:2x2x1
jax: 0.10.0
libtpu: 0.0.40
codegen_flags: <defaults>
</compile_context>

<pallas_src>
import math

import jax
import jax.numpy as jnp
from jax.experimental import pallas as pl
from jax.experimental.pallas import tpu as pltpu


# --------------------------------------------------------------------------
# Small helpers
# --------------------------------------------------------------------------
def _is_v5e():
    try:
        kind = jax.devices()[0].device_kind.lower()
        return ("v5 lite" in kind) or ("v5e" in kind) or ("v5litepod" in kind)
    except Exception:  # pragma: no cover
        return False


_MAX_COUT_TILE = 128 if _is_v5e() else 256      # v6e/v7x MXU is 256 wide


def _pick_cout_tile(cout):
    for tn in (_MAX_COUT_TILE, 128):
        if tn <= cout and cout % tn == 0:
            return tn
    return cout


def _largest_divisor_leq(n, cap):
    cap = max(1, min(n, cap))
    for d in range(cap, 0, -1):
        if n % d == 0:
            return d
    return 1


def _compiler_params(dims, working_set_bytes=None):
    kwargs = dict(dimension_semantics=dims)
    if working_set_bytes is not None:
        # working set + 25% headroom, clamped so it stays well under v7x's
        # 64 MiB per-core physical VMEM (leaves room for Mosaic scratch).
        limit = int(working_set_bytes) * 5 // 4 + (4 << 20)
        limit = min(max(limit, 32 << 20), 56 << 20)
        kwargs["vmem_limit_bytes"] = limit
    return pltpu.CompilerParams(**kwargs)


# --------------------------------------------------------------------------
# Fused 3x3 conv + folded BatchNorm + ReLU (full image per block, in-kernel
# row-chunk loop, 3 dots of K = 3*Cin per chunk)
# --------------------------------------------------------------------------
def _make_conv3x3_kernel(th, nchunks):
    """Refs (batch dim squeezed out of the blocks):
       x_ref: (H+2, W+2, Cin)  zero-padded bf16 input image
       w_ref: (3, 3*Cin, tn)   per-dy weights, dx-major on the K axis (bf16)
       b_ref: (1, tn)          folded BN/conv bias (f32)
       o_ref: (H, W, tn)       bf16 output tile
    """
    def kernel(x_ref, w_ref, b_ref, o_ref):
        H, W, tn = o_ref.shape
        Cin = x_ref.shape[-1]
        bias = b_ref[...]                                    # (1, tn) f32

        def row_chunk(r0):
            acc = jnp.zeros((th * W, tn), jnp.float32)
            for dy in range(3):                              # 3 dots of K = 3*Cin
                slab = x_ref[pl.ds(r0 + dy, th), :, :]       # (th, W+2, Cin)
                lhs = jnp.concatenate(
                    [slab[:, 0:W, :], slab[:, 1:W + 1, :], slab[:, 2:W + 2, :]],
                    axis=-1).reshape(th * W, 3 * Cin)        # dx-major K axis
                acc = acc + jnp.dot(lhs, w_ref[dy],
                                    preferred_element_type=jnp.float32)
            y = jnp.maximum(acc + bias, 0.0)                 # bias + ReLU (f32)
            o_ref[pl.ds(r0, th), :, :] = y.reshape(th, W, tn).astype(o_ref.dtype)

        if nchunks <= 4:                                     # short: unroll statically
            for c in range(nchunks):
                row_chunk(c * th)
        else:
            @pl.loop(0, nchunks)
            def _(c):
                row_chunk(pl.multiple_of(c * th, th))

    return kernel


def _conv3x3_bn_relu_dense(x, w, scale, bias):
    """x: (N,H,W,Cin) bf16/f32 NHWC; w: (3,3,Cin,Cout) f32. Returns bf16 NHWC."""
    N, H, W, Cin = x.shape
    Cout = w.shape[-1]

    wf = (w * scale[None, None, None, :]).astype(jnp.bfloat16)   # fold BN scale
    w3 = wf.reshape(3, 3 * Cin, Cout)                            # (dy, dx*Cin+cin, cout)
    b2 = bias.reshape(1, Cout).astype(jnp.float32)

    # TODO(synk): fuse the zero halo into the kernel (manual DMA into a
    # pre-zeroed scratch) to drop this extra HBM copy of the input per layer.
    xp = jnp.pad(x.astype(jnp.bfloat16), ((0, 0), (1, 1), (1, 1), (0, 0)))

    tn = _pick_cout_tile(Cout)
    nj = Cout // tn
    # In-kernel row chunks: keep the f32 accumulator around 0.5-2 MiB.
    th = _largest_divisor_leq(H, max(1, 2048 // max(1, W)))
    nchunks = H // th

    # TODO(synk): inputs much larger than ~300x300 would need row-band tiling
    # (manual DMA with halos) instead of a full-image input block.
    ws = (2 * ((H + 2) * (W + 2) * Cin * 2            # double-buffered input image
               + 3 * 3 * Cin * tn * 2                 # double-buffered weight tile
               + H * W * tn * 2)                      # double-buffered output
          + th * W * tn * 4                           # f32 accumulator
          + 2 * th * W * 3 * Cin * 2)                 # stacked-K operand copies

    return pl.pallas_call(
        _make_conv3x3_kernel(th, nchunks),
        out_shape=jax.ShapeDtypeStruct((N, H, W, Cout), jnp.bfloat16),
        grid=(nj, N),            # Cout tiles outermost: each weight tile is
                                 # DMA'd once and revisited across the batch.
        in_specs=[
            pl.BlockSpec((None, H + 2, W + 2, Cin), lambda j, n: (n, 0, 0, 0)),
            pl.BlockSpec((3, 3 * Cin, tn), lambda j, n: (0, 0, j)),
            pl.BlockSpec((1, tn), lambda j, n: (0, j)),
        ],
        out_specs=pl.BlockSpec((None, H, W, tn), lambda j, n: (n, 0, 0, j)),
        compiler_params=_compiler_params(("parallel", "parallel"), ws),
    )(xp, w3, b2)


# --------------------------------------------------------------------------
# First layer (tiny Cin): host-side im2col -> one dense K~32 matmul per tile
# --------------------------------------------------------------------------
def _im2col_matmul_kernel(x_ref, w_ref, b_ref, o_ref):
    """x_ref: (th, W, K) bf16; w_ref: (K, tn) bf16; b_ref: (1, tn) f32."""
    th, W, tn = o_ref.shape
    K = x_ref.shape[-1]
    lhs = x_ref[...].reshape(th * W, K)
    acc = jnp.dot(lhs, w_ref[...], preferred_element_type=jnp.float32)
    y = jnp.maximum(acc + b_ref[...], 0.0)
    o_ref[...] = y.reshape(th, W, tn).astype(o_ref.dtype)


def _conv3x3_bn_relu_im2col(x, w, scale, bias):
    N, H, W, Cin = x.shape
    Cout = w.shape[-1]

    wf = (w * scale[None, None, None, :]).astype(jnp.bfloat16)
    xp = jnp.pad(x.astype(jnp.bfloat16), ((0, 0), (1, 1), (1, 1), (0, 0)))
    cols = [xp[:, dy:dy + H, dx:dx + W, :] for dy in range(3) for dx in range(3)]
    xc = jnp.concatenate(cols, axis=-1)                       # (N, H, W, 9*Cin)
    K = 9 * Cin
    Kp = K + (-K) % 8                                         # e.g. 27 -> 32
    if Kp != K:
        xc = jnp.pad(xc, ((0, 0), (0, 0), (0, 0), (0, Kp - K)))
    w2 = wf.reshape(K, Cout)
    if Kp != K:
        w2 = jnp.pad(w2, ((0, Kp - K), (0, 0)))
    b2 = bias.reshape(1, Cout).astype(jnp.float32)

    tn = _pick_cout_tile(Cout)
    nj = Cout // tn
    th = _largest_divisor_leq(H, max(1, 4096 // max(1, W)))
    nr = H // th

    ws = (2 * (th * W * Kp * 2 + Kp * tn * 2 + th * W * tn * 2)
          + th * W * tn * 4)

    return pl.pallas_call(
        _im2col_matmul_kernel,
        out_shape=jax.ShapeDtypeStruct((N, H, W, Cout), jnp.bfloat16),
        grid=(nj, N, nr),
        in_specs=[
            pl.BlockSpec((None, th, W, Kp), lambda j, n, i: (n, i, 0, 0)),
            pl.BlockSpec((Kp, tn), lambda j, n, i: (0, j)),
            pl.BlockSpec((1, tn), lambda j, n, i: (0, j)),
        ],
        out_specs=pl.BlockSpec((None, th, W, tn), lambda j, n, i: (n, i, 0, j)),
        compiler_params=_compiler_params(("parallel",) * 3, ws),
    )(xc, w2, b2)


@jax.jit
def conv3x3_bn_relu(x, w, scale, bias):
    """x: (N,H,W,Cin) NHWC; w: (3,3,Cin,Cout); scale/bias: folded eval BN.
    Returns (N,H,W,Cout) bf16."""
    Cin = x.shape[-1]
    if Cin < 8:                       # the RGB first layer: im2col path
        return _conv3x3_bn_relu_im2col(x, w, scale, bias)
    return _conv3x3_bn_relu_dense(x, w, scale, bias)


# --------------------------------------------------------------------------
# MaxPool2d(kernel_size=2, stride=2) — single read, in-kernel reduce
# --------------------------------------------------------------------------
def _maxpool2x2_kernel(x_ref, o_ref):
    """x_ref: (tho, 2, Wo, 2*C) row-pair view; o_ref: (tho, Wo, C)."""
    tho, Wo, C = o_ref.shape
    v = x_ref[...]                                   # (tho, 2, Wo, 2C)
    m = jnp.maximum(v[:, 0], v[:, 1])                # reduce the row pair
    o_ref[...] = jnp.maximum(m[..., :C], m[..., C:])  # reduce the column pair


@jax.jit
def maxpool2x2(x):
    """x: (N, H, W, C) NHWC with even H, W. Returns (N, H//2, W//2, C)."""
    N, H, W, C = x.shape
    # TODO(synk): torch MaxPool2d floors odd spatial sizes; only even handled.
    assert H % 2 == 0 and W % 2 == 0, (H, W)
    Ho, Wo = H // 2, W // 2
    # Pure row-major reinterpretation, no HBM copy: (N,H,W,C) -> (N,Ho,2,Wo,2C)
    xr = x.reshape(N, Ho, 2, Wo, 2 * C)
    row_bytes = 2 * Wo * 2 * C * x.dtype.itemsize
    tho = _largest_divisor_leq(Ho, max(1, (8 << 20) // row_bytes))   # ~8 MiB in / step
    ws = 2 * (tho * row_bytes + tho * Wo * C * x.dtype.itemsize)
    return pl.pallas_call(
        _maxpool2x2_kernel,
        out_shape=jax.ShapeDtypeStruct((N, Ho, Wo, C), x.dtype),
        grid=(N, Ho // tho),
        in_specs=[pl.BlockSpec((None, tho, 2, Wo, 2 * C),
                               lambda n, i: (n, i, 0, 0, 0))],
        out_specs=pl.BlockSpec((None, tho, Wo, C), lambda n, i: (n, i, 0, 0)),
        compiler_params=_compiler_params(("parallel", "parallel"), ws),
    )(xr)


# --------------------------------------------------------------------------
# VGG19_bn features[:40] config + deterministic synthetic parameters
# --------------------------------------------------------------------------
# Conv channel plan per stage; each stage ends with MaxPool2d(2,2). The slice
# features[:40] contains exactly 4 pools, so 4 (pre-pool) feature maps return.
VGG19_STAGES = ((64, 64), (128, 128), (256, 256, 256, 256), (512, 512, 512, 512))
_BN_EPS = 1e-5


def init_vgg19_bn_params(key, in_channels=3):
    params = []
    cin = in_channels
    for stage in VGG19_STAGES:
        stage_params = []
        for cout in stage:
            key, kw, kb, kg, kbe, km, kv = jax.random.split(key, 7)
            fan_in = cin * 9
            w = jax.random.normal(kw, (3, 3, cin, cout), jnp.float32) * math.sqrt(2.0 / fan_in)
            b = 0.01 * jax.random.normal(kb, (cout,), jnp.float32)            # conv bias
            gamma = 1.0 + 0.1 * jax.random.normal(kg, (cout,), jnp.float32)   # BN weight
            beta = 0.1 * jax.random.normal(kbe, (cout,), jnp.float32)         # BN bias
            rmean = 0.1 * jax.random.normal(km, (cout,), jnp.float32)
            rvar = jax.random.uniform(kv, (cout,), jnp.float32, 0.5, 1.5)
            # Fold eval-mode BN (running stats) + conv bias into scale / bias.
            # TODO(synk): training-mode BatchNorm (batch statistics) is not modeled.
            scale = gamma / jnp.sqrt(rvar + _BN_EPS)
            bias = beta + (b - rmean) * scale
            stage_params.append((w, scale, bias))
            cin = cout
        params.append(stage_params)
    return params


def vgg19_bn_features(x_nchw, params, *, channels_last=False,
                      feature_dtype=jnp.float32):
    """Mirrors VGG19.forward: returns (feats, sizes); feats are the pre-pool
    activations of each stage (NCHW float32 by default, like torch)."""
    x = jnp.transpose(x_nchw, (0, 2, 3, 1)).astype(jnp.bfloat16)   # NCHW -> NHWC
    feats, sizes = [], []
    for s, stage_params in enumerate(params):
        for (w, scale, bias) in stage_params:
            x = conv3x3_bn_relu(x, w, scale, bias)
        sizes.append((x.shape[1], x.shape[2]))         # == torch x.shape[-2:]
        if channels_last:
            feats.append(x.astype(feature_dtype))
        else:
            # TODO(synk): drop this transpose+upcast if the consumer can take NHWC bf16.
            feats.append(jnp.transpose(x, (0, 3, 1, 2)).astype(feature_dtype))
        if s + 1 < len(params):
            x = maxpool2x2(x)   # the last pool's output is discarded in torch too
    return feats, sizes


# --------------------------------------------------------------------------
# Pure-JAX reference (same bf16 quantization of weights / inter-layer acts)
# --------------------------------------------------------------------------
def _reference_features(x_nchw, params):
    x = jnp.transpose(x_nchw, (0, 2, 3, 1)).astype(jnp.bfloat16).astype(jnp.float32)
    feats = []
    for s, stage_params in enumerate(params):
        for (w, scale, bias) in stage_params:
            wq = (w * scale[None, None, None, :]).astype(jnp.bfloat16).astype(jnp.float32)
            y = jax.lax.conv_general_dilated(
                x, wq, (1, 1), "SAME",
                dimension_numbers=("NHWC", "HWIO", "NHWC"),
                precision=jax.lax.Precision.HIGHEST)
            y = jnp.maximum(y + bias, 0.0)
            x = y.astype(jnp.bfloat16).astype(jnp.float32)
        feats.append(jnp.transpose(x, (0, 3, 1, 2)))
        if s + 1 < len(params):
            N, H, W, C = x.shape
            x = x.reshape(N, H // 2, 2, W // 2, 2, C).max(axis=(2, 4))
    return feats


if __name__ == "__main__":
    key = jax.random.PRNGKey(0)
    kx, kp = jax.random.split(key)
    x = jax.random.normal(kx, (2, 3, 16, 16), jnp.float32)   # small NCHW image batch
    params = init_vgg19_bn_params(kp)

    feats, sizes = vgg19_bn_features(x, params)
    feats = jax.block_until_ready(feats)

    expected_shapes = [(2, 64, 16, 16), (2, 128, 8, 8), (2, 256, 4, 4), (2, 512, 2, 2)]
    assert [tuple(f.shape) for f in feats] == expected_shapes, [f.shape for f in feats]
    assert sizes == [(16, 16), (8, 8), (4, 4), (2, 2)], sizes
    assert all(bool(jnp.all(jnp.isfinite(f))) for f in feats)

    # Full-network numerical check against a pure-JAX reference built from the
    # same bf16-quantized operands (only accumulation-order differences remain).
    ref_feats = _reference_features(x, params)
    for stage_idx, (got, ref) in enumerate(zip(feats, ref_feats)):
        denom = max(1.0, float(jnp.max(jnp.abs(ref))))
        err = float(jnp.max(jnp.abs(got - ref)))
        assert err <= 5e-2 * denom, (stage_idx, err, denom)

    print("KERNEL_OK")
</pallas_src>

<mosaic_0001>
module attributes {stable_mosaic.version = 11 : i64} {
  func.func @_im2col_matmul_kernel(%arg0: i32, %arg1: i32, %arg2: i32, %arg3: memref<1x16x16x32xbf16, #tpu.memory_space<vmem>>, %arg4: memref<32x64xbf16, #tpu.memory_space<vmem>>, %arg5: memref<1x64xf32, #tpu.memory_space<vmem>>, %arg6: memref<1x16x16x64xbf16, #tpu.memory_space<vmem>>) attributes {dimension_semantics = [#tpu.dimension_semantics<parallel>, #tpu.dimension_semantics<parallel>, #tpu.dimension_semantics<parallel>], iteration_bounds = array<i64: 1, 2, 1>, scalar_prefetch = 0 : i64, scratch_operands = 0 : i64, tpu.core_type = #tpu.core_type<tc>, window_params = [{transform_indices = @transform_0, window_bounds = array<i64: 1, 16, 16, 32>}, {transform_indices = @transform_1, window_bounds = array<i64: 32, 64>}, {transform_indices = @transform_2, window_bounds = array<i64: 1, 64>}, {transform_indices = @transform_3, window_bounds = array<i64: 1, 16, 16, 64>}]} {
    %c0 = arith.constant 0 : index
    %c0_0 = arith.constant 0 : index
    %c0_1 = arith.constant 0 : index
    %c0_2 = arith.constant 0 : index
    %0 = vector.load %arg3[%c0, %c0_0, %c0_1, %c0_2] : memref<1x16x16x32xbf16, #tpu.memory_space<vmem>>, vector<1x16x16x32xbf16>
    %1 = vector.shape_cast %0 : vector<1x16x16x32xbf16> to vector<16x16x32xbf16>
    %2 = vector.shape_cast %1 : vector<16x16x32xbf16> to vector<256x32xbf16>
    %c0_3 = arith.constant 0 : index
    %c0_4 = arith.constant 0 : index
    %3 = vector.load %arg4[%c0_3, %c0_4] : memref<32x64xbf16, #tpu.memory_space<vmem>>, vector<32x64xbf16>
    %cst = arith.constant dense<0.000000e+00> : vector<256x64xf32>
    %4 = tpu.matmul %2, %3, %cst {dimension_numbers = #tpu.dot_dimension_numbers<[1], [0], [0], [1], [0, 0, 1, 1], [], []>} : vector<256x32xbf16>, vector<32x64xbf16>, vector<256x64xf32> -> vector<256x64xf32>
    %c0_5 = arith.constant 0 : index
    %c0_6 = arith.constant 0 : index
    %5 = vector.load %arg5[%c0_5, %c0_6] : memref<1x64xf32, #tpu.memory_space<vmem>>, vector<1x64xf32>
    %6 = vector.broadcast %5 : vector<1x64xf32> to vector<256x64xf32>
    %7 = arith.addf %4, %6 : vector<256x64xf32>
    %cst_7 = arith.constant 0.000000e+00 : f32
    %8 = vector.broadcast %cst_7 : f32 to vector<256x64xf32>
    %9 = arith.maximumf %7, %8 : vector<256x64xf32>
    %10 = vector.shape_cast %9 : vector<256x64xf32> to vector<16x16x64xf32>
    %11 = arith.truncf %10 : vector<16x16x64xf32> to vector<16x16x64xbf16>
    %c0_8 = arith.constant 0 : index
    %c0_9 = arith.constant 0 : index
    %c0_10 = arith.constant 0 : index
    %c0_11 = arith.constant 0 : index
    %12 = vector.load %arg6[%c0_8, %c0_9, %c0_10, %c0_11] : memref<1x16x16x64xbf16, #tpu.memory_space<vmem>>, vector<1x16x16x64xbf16>
    %13 = vector.shape_cast %12 : vector<1x16x16x64xbf16> to vector<16x16x64xbf16>
    %14 = vector.shape_cast %11 : vector<16x16x64xbf16> to vector<1x16x16x64xbf16>
    tpu.vector_store %arg6[%c0_8, %c0_9, %c0_10, %c0_11], %14 {strides = array<i32>} : memref<1x16x16x64xbf16, #tpu.memory_space<vmem>>, vector<1x16x16x64xbf16>,
    return
  }
  func.func @transform_0(%arg0: i32, %arg1: i32, %arg2: i32) -> (i32, i32, i32, i32) {
    %c0_i32 = arith.constant 0 : i32
    %c0_i32_0 = arith.constant 0 : i32
    %c0_i32_1 = arith.constant 0 : i32
    return %arg1, %arg2, %c0_i32, %c0_i32_0 : i32, i32, i32, i32
  }
  func.func @transform_1(%arg0: i32, %arg1: i32, %arg2: i32) -> (i32, i32) {
    %c0_i32 = arith.constant 0 : i32
    %c0_i32_0 = arith.constant 0 : i32
    return %c0_i32, %arg0 : i32, i32
  }
  func.func @transform_2(%arg0: i32, %arg1: i32, %arg2: i32) -> (i32, i32) {
    %c0_i32 = arith.constant 0 : i32
    %c0_i32_0 = arith.constant 0 : i32
    return %c0_i32, %arg0 : i32, i32
  }
  func.func @transform_3(%arg0: i32, %arg1: i32, %arg2: i32) -> (i32, i32, i32, i32) {
    %c0_i32 = arith.constant 0 : i32
    %c0_i32_0 = arith.constant 0 : i32
    return %arg1, %arg2, %c0_i32, %arg0 : i32, i32, i32, i32
  }
}

</mosaic_0001>

<llo_original>
// kernel: conv3x3_bn_relu.1
$region0: #{conv3x3_bn_relu.1}
  #allocation0 [shape = 'u32[]', space=smem, size = 0x4, offset = 0x4, fixed_abs, tag = 'smem constant byte address 0x4 - core index']
  #allocation1 [shape = 'u32[144,128]{1,0:T(1,128)}', space=vmem, size = 0x12000, scoped, tag = 'internal scratch']
  %s0 = inlined_call_operand.vmem [shape: bf16[2,16,16,32], index: 0, kind: input, shape index: {}]
  %s1 = inlined_call_operand.vmem [shape: bf16[32,64], index: 1, kind: input, shape index: {}]
  %s2 = inlined_call_operand.vmem [shape: f32[1,64], index: 2, kind: input, shape index: {}]
  %s3 = inlined_call_operand.hbm [shape: bf16[2,16,16,64], index: 3, kind: output, shape index: {}]
  %s4 = sld [smem:[#allocation0]]
  $region45: #{conv3x3_bn_relu.1} parent=0
    _
  %s6 = ssub.s32 1, %s4
  %s7 = scalar_select 0, %s6, %s4
  $region1: #{conv3x3_bn_relu.1} parent=0
    #allocation2 [shape = 'u8[131072]{0}', space=vmem, size = 0x20000, scoped, tag = 'output window, operand 0']
    #allocation3 [shape = 's32[2]{0}', space=sflag, size = 0x8, scoped, tag = 'scoped memory for conv3x3_bn_relu.1']
    %8 = vsyncpa [#allocation3], 0
    %s9 = scalar_lea.sflag [#allocation3], 1
    %10 = vsyncpa %s9, 0
    loop: start=0, step=1, limit=4
    $region2: #{conv3x3_bn_relu.1} parent=1 // loop_pre_header
      _
    $region3: #{conv3x3_bn_relu.1} parent=1 // loop_header
      %s12 = sphi 0, %s16
      %p13 = scmp.ge.s32.totalorder %s12, 4
      %s19 = sphi 0, %s38
      %s20 = sphi 0, %s34
      %s21 = sphi 0, %s30
      %s22 = sphi 0, %s19
      %s23 = sphi 0, %s20
      %s24 = sphi 0, %s21
      %s25 = sphi 0, %s22
      %s26 = sphi 0, %s23
      %s27 = sphi 0, %s24
      %s43 = sphi 0, %s45
      %s46 = sphi 0, %s43
      %s47 = sphi 0, %s46
      %s63 = sphi 0, %s47
      %s69 = sphi 0, %s71
      %s72 = sphi 0, %s69
      %s73 = sphi 0, %s72
      %s89 = sphi 0, %s73
      %s95 = sphi 0, %s97
      %s98 = sphi 0, %s95
      %s99 = sphi 0, %s98
      %s115 = sphi 0, %s99
      %s125 = sphi 0, %s127
      %s128 = sphi 0, %s125
      %s129 = sphi 0, %s128
      %s145 = sphi 0, %s129
    $region4: #{conv3x3_bn_relu.1} parent=1 // loop_header_branch
      %15 = sbr.rel (%p13) target = $region8
    $region5: #{conv3x3_bn_relu.1} parent=1 // loop_body
      %s17 = ssub.s32 %s12, 1
      %s18 = ssub.s32 %s12, 2
      %s28 = sadd.s32 1, %s21
      %p29 = scmp.ge.s32.totalorder %s28, 1
      %s30 = scalar_select %p29, 0, %s28
      %s31 = sadd.s32 1, %s20
      %s32 = scalar_select %p29, %s31, %s20
      %p33 = scmp.ge.s32.totalorder %s32, 2
      %s34 = scalar_select %p33, 0, %s32
      %s35 = sadd.s32 1, %s19
      %s36 = scalar_select %p33, %s35, %s19
      %p37 = scmp.ge.s32.totalorder %s36, 1
      %s38 = scalar_select %p37, 0, %s36
      %s39 = ssub.s32 %s20, %s34
      %s40 = ssub.s32 %s21, %s30
      %s41 = sor.u32 %s39, %s40
      %p42 = scmp.eq.s32.totalorder %s41, 0
      %s44 = sadd.s32 %s43, 1
      %s45 = scalar_select %p42, %s43, %s44
      %p48 = pneg %p42
      %p49 = scmp.eq.s32.totalorder %s12, 1
      %p50 = por %p48, %p49
      %p51 = scmp.ne.s32.totalorder %s43, %s46
      %p52 = scmp.eq.s32.totalorder %s12, 0
      %p53 = por %p51, %p52
      %p54 = scmp.ne.s32.totalorder %s43, %s46
      %p55 = scmp.eq.s32.totalorder %s17, 1
      %p56 = por %p54, %p55
      %p57 = scmp.ne.s32.totalorder %s46, %s47
      %p58 = scmp.eq.s32.totalorder %s17, 0
      %p59 = por %p57, %p58
      %p60 = scmp.ne.s32.totalorder %s46, %s47
      %p61 = scmp.eq.s32.totalorder %s18, 1
      %p62 = por %p60, %p61
      %p64 = scmp.ne.s32.totalorder %s47, %s63
      %p65 = scmp.eq.s32.totalorder %s18, 0
      %p66 = por %p64, %p65
      %s67 = ssub.s32 %s19, %s38
      %p68 = scmp.eq.s32.totalorder %s67, 0
      %s70 = sadd.s32 %s69, 1
      %s71 = scalar_select %p68, %s69, %s70
      %p74 = pneg %p68
      %p75 = scmp.eq.s32.totalorder %s12, 1
      %p76 = por %p74, %p75
      %p77 = scmp.ne.s32.totalorder %s69, %s72
      %p78 = scmp.eq.s32.totalorder %s12, 0
      %p79 = por %p77, %p78
      %p80 = scmp.ne.s32.totalorder %s69, %s72
      %p81 = scmp.eq.s32.totalorder %s17, 1
      %p82 = por %p80, %p81
      %p83 = scmp.ne.s32.totalorder %s72, %s73
      %p84 = scmp.eq.s32.totalorder %s17, 0
      %p85 = por %p83, %p84
      %p86 = scmp.ne.s32.totalorder %s72, %s73
      %p87 = scmp.eq.s32.totalorder %s18, 1
      %p88 = por %p86, %p87
      %p90 = scmp.ne.s32.totalorder %s73, %s89
      %p91 = scmp.eq.s32.totalorder %s18, 0
      %p92 = por %p90, %p91
      %s93 = ssub.s32 %s19, %s38
      %p94 = scmp.eq.s32.totalorder %s93, 0
      %s96 = sadd.s32 %s95, 1
      %s97 = scalar_select %p94, %s95, %s96
      %p100 = pneg %p94
      %p101 = scmp.eq.s32.totalorder %s12, 1
      %p102 = por %p100, %p101
      %p103 = scmp.ne.s32.totalorder %s95, %s98
      %p104 = scmp.eq.s32.totalorder %s12, 0
      %p105 = por %p103, %p104
      %p106 = scmp.ne.s32.totalorder %s95, %s98
      %p107 = scmp.eq.s32.totalorder %s17, 1
      %p108 = por %p106, %p107
      %p109 = scmp.ne.s32.totalorder %s98, %s99
      %p110 = scmp.eq.s32.totalorder %s17, 0
      %p111 = por %p109, %p110
      %p112 = scmp.ne.s32.totalorder %s98, %s99
      %p113 = scmp.eq.s32.totalorder %s18, 1
      %p114 = por %p112, %p113
      %p116 = scmp.ne.s32.totalorder %s99, %s115
      %p117 = scmp.eq.s32.totalorder %s18, 0
      %p118 = por %p116, %p117
      %s119 = ssub.s32 %s20, %s34
      %s120 = ssub.s32 %s21, %s30
      %s121 = sor.u32 %s119, %s120
      %s122 = ssub.s32 %s19, %s38
      %s123 = sor.u32 %s121, %s122
      %p124 = scmp.eq.s32.totalorder %s123, 0
      %s126 = sadd.s32 %s125, 1
      %s127 = scalar_select %p124, %s125, %s126
      %p130 = pneg %p124
      %p131 = scmp.eq.s32.totalorder %s12, 1
      %p132 = por %p130, %p131
      %p133 = scmp.ne.s32.totalorder %s125, %s128
      %p134 = scmp.eq.s32.totalorder %s12, 0
      %p135 = por %p133, %p134
      %p136 = scmp.ne.s32.totalorder %s125, %s128
      %p137 = scmp.eq.s32.totalorder %s17, 1
      %p138 = por %p136, %p137
      %p139 = scmp.ne.s32.totalorder %s128, %s129
      %p140 = scmp.eq.s32.totalorder %s17, 0
      %p141 = por %p139, %p140
      %p142 = scmp.ne.s32.totalorder %s128, %s129
      %p143 = scmp.eq.s32.totalorder %s18, 1
      %p144 = por %p142, %p143
      %p146 = scmp.ne.s32.totalorder %s129, %s145
      %p147 = scmp.eq.s32.totalorder %s18, 0
      %p148 = por %p146, %p147
      %p149 = scmp.le.s32.totalorder 1, %s12
      %p150 = scmp.lt.s32.totalorder %s12, 3
      %p151 = pnand %p149, %p150
      %p152 = pneg %p151
      // Predicated region
      $region9: #{conv3x3_bn_relu.1} parent=5 // pred_check
        _
      $region10: #{conv3x3_bn_relu.1} parent=5 // pred_check_branch
        %154 = sbr.rel (%p151) target = $region12
      $region11: #{conv3x3_bn_relu.1} parent=5 // pred_region
        %s155 = ssub.s32 %s12, 1
        // Predicated region
        $region13: #{conv3x3_bn_relu.1} parent=11 // pred_check
          %p156 = pneg %p85
        $region14: #{conv3x3_bn_relu.1} parent=11 // pred_check_branch
          %158 = sbr.rel (%p156) target = $region16
        $region15: #{conv3x3_bn_relu.1} parent=11 // pred_region
          %p159 = scmp.lt.s32.totalorder %s22, 0
          %s160 = scalar_select %p159, %s22, 0
          %s161 = smul.addr %s160, 4
          %s162 = scalar_lea.vmem %s1, %s161
        $region16: #{conv3x3_bn_relu.1} parent=11 // pred_fallthru
          _
        // Predicated region
        $region17: #{conv3x3_bn_relu.1} parent=11 // pred_check
          %p163 = pneg %p111
        $region18: #{conv3x3_bn_relu.1} parent=11 // pred_check_branch
          %165 = sbr.rel (%p163) target = $region20
        $region19: #{conv3x3_bn_relu.1} parent=11 // pred_region
          %p166 = scmp.lt.s32.totalorder %s22, 0
          %s167 = scalar_select %p166, %s22, 0
          %s168 = scalar_lea.vmem %s2, %s167
        $region20: #{conv3x3_bn_relu.1} parent=11 // pred_fallthru
          _
      $region12: #{conv3x3_bn_relu.1} parent=5 // pred_fallthru
        _
      %p169 = scmp.lt.s32.totalorder %s12, 2
      // Predicated region
      $region21: #{conv3x3_bn_relu.1} parent=5 // pred_check
        %p170 = pneg %p169
      $region22: #{conv3x3_bn_relu.1} parent=5 // pred_check_branch
        %172 = sbr.rel (%p170) target = $region24
      $region23: #{conv3x3_bn_relu.1} parent=5 // pred_region
        // Predicated region
        $region25: #{conv3x3_bn_relu.1} parent=23 // pred_check
          %p173 = pneg %p53
        $region26: #{conv3x3_bn_relu.1} parent=23 // pred_check_branch
          %175 = sbr.rel (%p173) target = $region28
        $region27: #{conv3x3_bn_relu.1} parent=23 // pred_region
          %s176 = smul.u32 16, %s21
          %p177 = scmp.lt.s32.totalorder %s20, 1
          %s178 = scalar_select %p177, %s20, 1
          %p179 = scmp.lt.s32.totalorder %s176, 15
          %s180 = scalar_select %p179, %s176, 15
          %s181 = smul.addr %s180, 2
          %s182 = smul.addr %s178, 32
          %s183 = sadd.s32 %s181, %s182
          %s184 = smul.addr %s183, 4
          %s185 = scalar_lea.vmem %s0, %s184
          %s186 = smul.u32 16, %s21
        $region28: #{conv3x3_bn_relu.1} parent=23 // pred_fallthru
          _
      $region24: #{conv3x3_bn_relu.1} parent=5 // pred_fallthru
        _
      %p187 = scmp.le.s32.totalorder 1, %s12
      %p188 = scmp.lt.s32.totalorder %s12, 3
      %p189 = pnand %p187, %p188
      %p190 = pneg %p189
      // Predicated region
      $region29: #{conv3x3_bn_relu.1} parent=5 // pred_check
        _
      $region30: #{conv3x3_bn_relu.1} parent=5 // pred_check_branch
        %192 = sbr.rel (%p189) target = $region32
      $region31: #{conv3x3_bn_relu.1} parent=5 // pred_region
        %s193 = ssub.s32 %s12, 1
        %s194 = smul.u32 16, %s24
        %p195 = scmp.lt.s32.totalorder %s23, 1
        %s196 = scalar_select %p195, %s23, 1
        %p197 = scmp.lt.s32.totalorder %s194, 15
        %s198 = scalar_select %p197, %s194, 15
        %s199 = smul.addr %s198, 2
        %s200 = smul.addr %s196, 32
        %s201 = sadd.s32 %s199, %s200
        %s202 = smul.addr %s201, 4
        %s203 = scalar_lea.vmem %s0, %s202
        %p204 = pneg %p59
        %p205 = pneg %p56
        %p206 = scmp.lt.s32.totalorder %s22, 0
        %s207 = scalar_select %p206, %s22, 0
        %s208 = smul.addr %s207, 4
        %s209 = scalar_lea.vmem %s1, %s208
        %p210 = pneg %p85
        %p211 = pneg %p82
        %p212 = scmp.lt.s32.totalorder %s22, 0
        %s213 = scalar_select %p212, %s22, 0
        %s214 = scalar_lea.vmem %s2, %s213
        %p215 = pneg %p111
        %p216 = pneg %p108
        %p217 = pneg %p141
        %p218 = pneg %p138
        %s219 = sand.u32 %s128, 1
        %s220 = scalar_lea.sflag [#allocation3], %s219
        %s221 = sand.u32 %s128, 1
        %s222 = smul.addr %s221, 128
        %s223 = scalar_lea.vmem [#allocation2], %s222
        %s224 = smul.u32 16, %s24
        %p225 = scmp.lt.s32.totalorder %s23, 1
        %s226 = scalar_select %p225, %s23, 1
        %p227 = scmp.lt.s32.totalorder %s224, 15
        %s228 = scalar_select %p227, %s224, 15
        %s229 = smul.addr %s228, 2
        %s230 = smul.addr %s226, 32
        %s231 = sadd.s32 %s229, %s230
        %s232 = smul.addr %s231, 4
        %s233 = scalar_lea.vmem %s0, %s232
        %s234 = smul.u32 16, %s24
        %p235 = scmp.lt.s32.totalorder %s22, 0
        %s236 = scalar_select %p235, %s22, 0
        %s237 = smul.addr %s236, 4
        %s238 = scalar_lea.vmem %s1, %s237
        %p239 = scmp.lt.s32.totalorder %s22, 0
        %s240 = scalar_select %p239, %s22, 0
        %s241 = scalar_lea.vmem %s2, %s240
        %s242 = smul.u32 16, %s24
        %v244 = vld [vmem:[%s233] sm:$0xf]
        %v245 = vld [vmem:[%s233 + $0x4] sm:$0xf]
        %v246 = vld [vmem:[%s233 + $0x8] sm:$0xf]
        %v247 = vld [vmem:[%s233 + $0xc] sm:$0xf]
        %v248 = vld [vmem:[%s233 + $0x10] sm:$0xf]
        %v249 = vld [vmem:[%s233 + $0x14] sm:$0xf]
        %v250 = vld [vmem:[%s233 + $0x18] sm:$0xf]
        %v251 = vld [vmem:[%s233 + $0x1c] sm:$0xf]
        %v252 = vld [vmem:[%s233 + $0x20] sm:$0xf]
        %v253 = vld [vmem:[%s233 + $0x24] sm:$0xf]
        %v254 = vld [vmem:[%s233 + $0x28] sm:$0xf]
        %v255 = vld [vmem:[%s233 + $0x2c] sm:$0xf]
        %v256 = vld [vmem:[%s233 + $0x30] sm:$0xf]
        %v257 = vld [vmem:[%s233 + $0x34] sm:$0xf]
        %v258 = vld [vmem:[%s233 + $0x38] sm:$0xf]
        %v259 = vld [vmem:[%s233 + $0x3c] sm:$0xf]
        %v260 = vld [vmem:[%s233 + $0x40] sm:$0xf]
        %v261 = vld [vmem:[%s233 + $0x44] sm:$0xf]
        %v262 = vld [vmem:[%s233 + $0x48] sm:$0xf]
        %v263 = vld [vmem:[%s233 + $0x4c] sm:$0xf]
        %v264 = vld [vmem:[%s233 + $0x50] sm:$0xf]
        %v265 = vld [vmem:[%s233 + $0x54] sm:$0xf]
        %v266 = vld [vmem:[%s233 + $0x58] sm:$0xf]
        %v267 = vld [vmem:[%s233 + $0x5c] sm:$0xf]
        %v268 = vld [vmem:[%s233 + $0x60] sm:$0xf]
        %v269 = vld [vmem:[%s233 + $0x64] sm:$0xf]
        %v270 = vld [vmem:[%s233 + $0x68] sm:$0xf]
        %v271 = vld [vmem:[%s233 + $0x6c] sm:$0xf]
        %v272 = vld [vmem:[%s233 + $0x70] sm:$0xf]
        %v273 = vld [vmem:[%s233 + $0x74] sm:$0xf]
        %v274 = vld [vmem:[%s233 + $0x78] sm:$0xf]
        %v275 = vld [vmem:[%s233 + $0x7c] sm:$0xf]
        %v276 = vld [vmem:[%s238] sm:$0xf]
        %v277 = vld [vmem:[%s238 + $0x4] sm:$0xf]
        %v278 = vld [vmem:[%s238 + $0x8] sm:$0xf]
        %v279 = vld [vmem:[%s238 + $0xc] sm:$0xf]
        %v280 = vld [vmem:[%s241] sm:$0x1]
        %v282 = vlaneseq
        %v283 = vshrl.u32 %v282, 7
        %v284 = vsub.s32 0, %v283
        %v285 = vrot.slane %v280, %v284
        %v319 = vunpack.c.l.b16 %v244
        %v320 = vunpack.c.l.b16 %v245
        %v321 = vunpack.c.l.b16 %v246
        %v322 = vunpack.c.l.b16 %v247
        %v323 = vunpack.c.l.b16 %v248
        %v324 = vunpack.c.l.b16 %v249
        %v325 = vunpack.c.l.b16 %v250
        %v326 = vunpack.c.l.b16 %v251
        %v327 = vunpack.c.l.b16 %v252
        %v328 = vunpack.c.l.b16 %v253
        %v329 = vunpack.c.l.b16 %v254
        %v330 = vunpack.c.l.b16 %v255
        %v331 = vunpack.c.l.b16 %v256
        %v332 = vunpack.c.l.b16 %v257
        %v333 = vunpack.c.l.b16 %v258
        %v334 = vunpack.c.l.b16 %v259
        %v335 = vunpack.c.l.b16 %v260
        %v336 = vunpack.c.l.b16 %v261
        %v337 = vunpack.c.l.b16 %v262
        %v338 = vunpack.c.l.b16 %v263
        %v339 = vunpack.c.l.b16 %v264
        %v340 = vunpack.c.l.b16 %v265
        %v341 = vunpack.c.l.b16 %v266
        %v342 = vunpack.c.l.b16 %v267
        %v343 = vunpack.c.l.b16 %v268
        %v344 = vunpack.c.l.b16 %v269
        %v345 = vunpack.c.l.b16 %v270
        %v346 = vunpack.c.l.b16 %v271
        %v347 = vunpack.c.l.b16 %v272
        %v348 = vunpack.c.l.b16 %v273
        %v349 = vunpack.c.l.b16 %v274
        %v350 = vunpack.c.l.b16 %v275
        %v351 = vpack.c.b16 %v320, %v319
        %v352 = vpack.c.b16 %v322, %v321
        %v353 = vpack.c.b16 %v324, %v323
        %v354 = vpack.c.b16 %v326, %v325
        %v355 = vpack.c.b16 %v328, %v327
        %v356 = vpack.c.b16 %v330, %v329
        %v357 = vpack.c.b16 %v332, %v331
        %v358 = vpack.c.b16 %v334, %v333
        %v359 = vpack.c.b16 %v336, %v335
        %v360 = vpack.c.b16 %v338, %v337
        %v361 = vpack.c.b16 %v340, %v339
        %v362 = vpack.c.b16 %v342, %v341
        %v363 = vpack.c.b16 %v344, %v343
        %v364 = vpack.c.b16 %v346, %v345
        %v365 = vpack.c.b16 %v348, %v347
        %v366 = vpack.c.b16 %v350, %v349
        %v371 = vunpack.c.l.b16 %v276
        %v372 = vunpack.c.l.b16 %v277
        %v373 = vunpack.c.l.b16 %v278
        %v374 = vunpack.c.l.b16 %v279
        %v375 = vpack.c.b16 %v372, %v371
        %v376 = vpack.c.b16 %v374, %v373
        %vm379 = vcmask 261120
        %v381 = vsel %vm379, %v351, 0
        %v384 = vsel %vm379, %v352, 0
        %v387 = vsel %vm379, %v353, 0
        %v390 = vsel %vm379, %v354, 0
        %v393 = vsel %vm379, %v355, 0
        %v396 = vsel %vm379, %v356, 0
        %v399 = vsel %vm379, %v357, 0
        %v402 = vsel %vm379, %v358, 0
        %v405 = vsel %vm379, %v359, 0
        %v408 = vsel %vm379, %v360, 0
        %v411 = vsel %vm379, %v361, 0
        %v414 = vsel %vm379, %v362, 0
        %v417 = vsel %vm379, %v363, 0
        %v420 = vsel %vm379, %v364, 0
        %v423 = vsel %vm379, %v365, 0
        %v426 = vsel %vm379, %v366, 0
        %428 = vmatprep.subr.bf16.mxu0 0
        %429 = vmatpush1.bf16.msra.mxu0 0
        %430 = vmatprep.subr.bf16.mxu0 0
        %431 = vmatpush1.bf16.msra.mxu0 0
        %432 = vmatprep.subr.bf16.mxu0 0
        %433 = vmatpush1.bf16.msra.mxu0 0
        %434 = vmatprep.subr.bf16.mxu0 0
        %435 = vmatpush1.bf16.msra.mxu0 0
        %436 = vmatprep.subr.bf16.mxu0 0
        %437 = vmatpush1.bf16.msra.mxu0 0
        %438 = vmatprep.subr.bf16.mxu0 0
        %439 = vmatpush1.bf16.msra.mxu0 0
        %440 = vmatprep.subr.bf16.mxu0 0
        %441 = vmatpush1.bf16.msra.mxu0 %v376
        %442 = vmatprep.subr.bf16.mxu0 0
        %443 = vmatpush1.bf16.msra.mxu0 %v375
        %444 = vmatprep.subr.bf16.mxu0 0
        %445 = vmatpush2.bf16.msra.mxu0 0
        %446 = vmatprep.subr.bf16.mxu0 0
        %447 = vmatpush2.bf16.msra.mxu0 0
        %448 = vmatprep.subr.bf16.mxu0 0
        %449 = vmatpush2.bf16.msra.mxu0 0
        %450 = vmatprep.subr.bf16.mxu0 0
        %451 = vmatpush2.bf16.msra.mxu0 0
        %452 = vmatprep.subr.bf16.mxu0 0
        %453 = vmatpush2.bf16.msra.mxu0 0
        %454 = vmatprep.subr.bf16.mxu0 0
        %455 = vmatpush2.bf16.msra.mxu0 0
        %456 = vmatprep.subr.bf16.mxu0 0
        %457 = vmatpush2.bf16.msra.mxu0 0
        %458 = vmatprep.subr.bf16.mxu0 0
        %459 = vmatpush2.bf16.msra.mxu0 0
        %460 = vmatprep.mubr.bf16.mxu0 0
        %461 = vmatmul.mubr.bf16.gmra.mxu0 %v381
        %v462 = vpop.f32.mrf.mxu0
        %v463 = vadd.f32 %v285, %v462
        %v464 = vpop.f32.mrf.mxu0
        %v465 = vpop.f32.mrf.mxu0
        %v466 = vadd.f32 %v285, %v465
        %v467 = vpop.f32.mrf.mxu0
        %468 = vmatprep.mubr.bf16.mxu0 0
        %469 = vmatmul.mubr.bf16.gmra.mxu0 %v384
        %v470 = vpop.f32.mrf.mxu0
        %v471 = vadd.f32 %v285, %v470
        %v472 = vpop.f32.mrf.mxu0
        %v473 = vpop.f32.mrf.mxu0
        %v474 = vadd.f32 %v285, %v473
        %v475 = vpop.f32.mrf.mxu0
        %476 = vmatprep.mubr.bf16.mxu0 0
        %477 = vmatmul.mubr.bf16.gmra.mxu0 %v387
        %v478 = vpop.f32.mrf.mxu0
        %v479 = vadd.f32 %v285, %v478
        %v480 = vpop.f32.mrf.mxu0
        %v481 = vpop.f32.mrf.mxu0
        %v482 = vadd.f32 %v285, %v481
        %v483 = vpop.f32.mrf.mxu0
        %484 = vmatprep.mubr.bf16.mxu0 0
        %485 = vmatmul.mubr.bf16.gmra.mxu0 %v390
        %v486 = vpop.f32.mrf.mxu0
        %v487 = vadd.f32 %v285, %v486
        %v488 = vpop.f32.mrf.mxu0
        %v489 = vpop.f32.mrf.mxu0
        %v490 = vadd.f32 %v285, %v489
        %v491 = vpop.f32.mrf.mxu0
        %492 = vmatprep.mubr.bf16.mxu0 0
        %493 = vmatmul.mubr.bf16.gmra.mxu0 %v393
        %v494 = vpop.f32.mrf.mxu0
        %v495 = vadd.f32 %v285, %v494
        %v496 = vpop.f32.mrf.mxu0
        %v497 = vpop.f32.mrf.mxu0
        %v498 = vadd.f32 %v285, %v497
        %v499 = vpop.f32.mrf.mxu0
        %500 = vmatprep.mubr.bf16.mxu0 0
        %501 = vmatmul.mubr.bf16.gmra.mxu0 %v396
        %v502 = vpop.f32.mrf.mxu0
        %v503 = vadd.f32 %v285, %v502
        %v504 = vpop.f32.mrf.mxu0
        %v505 = vpop.f32.mrf.mxu0
        %v506 = vadd.f32 %v285, %v505
        %v507 = vpop.f32.mrf.mxu0
        %508 = vmatprep.mubr.bf16.mxu0 0
        %509 = vmatmul.mubr.bf16.gmra.mxu0 %v399
        %v510 = vpop.f32.mrf.mxu0
        %v511 = vadd.f32 %v285, %v510
        %v512 = vpop.f32.mrf.mxu0
        %v513 = vpop.f32.mrf.mxu0
        %v514 = vadd.f32 %v285, %v513
        %v515 = vpop.f32.mrf.mxu0
        %516 = vmatprep.mubr.bf16.mxu0 0
        %517 = vmatmul.mubr.bf16.gmra.mxu0 %v402
        %v518 = vpop.f32.mrf.mxu0
        %v519 = vadd.f32 %v285, %v518
        %v520 = vpop.f32.mrf.mxu0
        %v521 = vpop.f32.mrf.mxu0
        %v522 = vadd.f32 %v285, %v521
        %v523 = vpop.f32.mrf.mxu0
        %524 = vmatprep.mubr.bf16.mxu0 0
        %525 = vmatmul.mubr.bf16.gmra.mxu0 %v405
        %v526 = vpop.f32.mrf.mxu0
        %v527 = vadd.f32 %v285, %v526
        %v528 = vpop.f32.mrf.mxu0
        %v529 = vpop.f32.mrf.mxu0
        %v530 = vadd.f32 %v285, %v529
        %v531 = vpop.f32.mrf.mxu0
        %532 = vmatprep.mubr.bf16.mxu0 0
        %533 = vmatmul.mubr.bf16.gmra.mxu0 %v408
        %v534 = vpop.f32.mrf.mxu0
        %v535 = vadd.f32 %v285, %v534
        %v536 = vpop.f32.mrf.mxu0
        %v537 = vpop.f32.mrf.mxu0
        %v538 = vadd.f32 %v285, %v537
        %v539 = vpop.f32.mrf.mxu0
        %540 = vmatprep.mubr.bf16.mxu0 0
        %541 = vmatmul.mubr.bf16.gmra.mxu0 %v411
        %v542 = vpop.f32.mrf.mxu0
        %v543 = vadd.f32 %v285, %v542
        %v544 = vpop.f32.mrf.mxu0
        %v545 = vpop.f32.mrf.mxu0
        %v546 = vadd.f32 %v285, %v545
        %v547 = vpop.f32.mrf.mxu0
        %548 = vmatprep.mubr.bf16.mxu0 0
        %549 = vmatmul.mubr.bf16.gmra.mxu0 %v414
        %v550 = vpop.f32.mrf.mxu0
        %v551 = vadd.f32 %v285, %v550
        %v552 = vpop.f32.mrf.mxu0
        %v553 = vpop.f32.mrf.mxu0
        %v554 = vadd.f32 %v285, %v553
        %v555 = vpop.f32.mrf.mxu0
        %556 = vmatprep.mubr.bf16.mxu0 0
        %557 = vmatmul.mubr.bf16.gmra.mxu0 %v417
        %v558 = vpop.f32.mrf.mxu0
        %v559 = vadd.f32 %v285, %v558
        %v560 = vpop.f32.mrf.mxu0
        %v561 = vpop.f32.mrf.mxu0
        %v562 = vadd.f32 %v285, %v561
        %v563 = vpop.f32.mrf.mxu0
        %564 = vmatprep.mubr.bf16.mxu0 0
        %565 = vmatmul.mubr.bf16.gmra.mxu0 %v420
        %v566 = vpop.f32.mrf.mxu0
        %v567 = vadd.f32 %v285, %v566
        %v568 = vpop.f32.mrf.mxu0
        %v569 = vpop.f32.mrf.mxu0
        %v570 = vadd.f32 %v285, %v569
        %v571 = vpop.f32.mrf.mxu0
        %572 = vmatprep.mubr.bf16.mxu0 0
        %573 = vmatmul.mubr.bf16.gmra.mxu0 %v423
        %v574 = vpop.f32.mrf.mxu0
        %v575 = vadd.f32 %v285, %v574
        %v576 = vpop.f32.mrf.mxu0
        %v577 = vpop.f32.mrf.mxu0
        %v578 = vadd.f32 %v285, %v577
        %v579 = vpop.f32.mrf.mxu0
        %580 = vmatprep.mubr.bf16.mxu0 0
        %581 = vmatmul.mubr.bf16.gmra.mxu0 %v426
        %v582 = vpop.f32.mrf.mxu0
        %v583 = vadd.f32 %v285, %v582
        %v584 = vpop.f32.mrf.mxu0
        %v585 = vpop.f32.mrf.mxu0
        %v586 = vadd.f32 %v285, %v585
        %v587 = vpop.f32.mrf.mxu0
        %588 = vdwg.mxu0
        %v589 = vmax.f32 %v463, 0.0
        %v590 = vmax.f32 %v466, 0.0
        %v591 = vmax.f32 %v471, 0.0
        %v592 = vmax.f32 %v474, 0.0
        %v593 = vmax.f32 %v479, 0.0
        %v594 = vmax.f32 %v482, 0.0
        %v595 = vmax.f32 %v487, 0.0
        %v596 = vmax.f32 %v490, 0.0
        %v597 = vmax.f32 %v495, 0.0
        %v598 = vmax.f32 %v498, 0.0
        %v599 = vmax.f32 %v503, 0.0
        %v600 = vmax.f32 %v506, 0.0
        %v601 = vmax.f32 %v511, 0.0
        %v602 = vmax.f32 %v514, 0.0
        %v603 = vmax.f32 %v519, 0.0
        %v604 = vmax.f32 %v522, 0.0
        %v605 = vmax.f32 %v527, 0.0
        %v606 = vmax.f32 %v530, 0.0
        %v607 = vmax.f32 %v535, 0.0
        %v608 = vmax.f32 %v538, 0.0
        %v609 = vmax.f32 %v543, 0.0
        %v610 = vmax.f32 %v546, 0.0
        %v611 = vmax.f32 %v551, 0.0
        %v612 = vmax.f32 %v554, 0.0
        %v613 = vmax.f32 %v559, 0.0
        %v614 = vmax.f32 %v562, 0.0
        %v615 = vmax.f32 %v567, 0.0
        %v616 = vmax.f32 %v570, 0.0
        %v617 = vmax.f32 %v575, 0.0
        %v618 = vmax.f32 %v578, 0.0
        %v619 = vmax.f32 %v583, 0.0
        %v620 = vmax.f32 %v586, 0.0
        %v621 = vpack.c.bf16 %v590, %v589
        %v622 = vpack.c.bf16 %v592, %v591
        %v623 = vpack.c.bf16 %v594, %v593
        %v624 = vpack.c.bf16 %v596, %v595
        %v625 = vpack.c.bf16 %v598, %v597
        %v626 = vpack.c.bf16 %v600, %v599
        %v627 = vpack.c.bf16 %v602, %v601
        %v628 = vpack.c.bf16 %v604, %v603
        %v629 = vpack.c.bf16 %v606, %v605
        %v630 = vpack.c.bf16 %v608, %v607
        %v631 = vpack.c.bf16 %v610, %v609
        %v632 = vpack.c.bf16 %v612, %v611
        %v633 = vpack.c.bf16 %v614, %v613
        %v634 = vpack.c.bf16 %v616, %v615
        %v635 = vpack.c.bf16 %v618, %v617
        %v636 = vpack.c.bf16 %v620, %v619
        %v653 = vunpack.c.l.b16 %v621
        %v654 = vunpack.c.h.b16 %v621
        %v655 = vunpack.c.l.b16 %v622
        %v656 = vunpack.c.h.b16 %v622
        %v657 = vunpack.c.l.b16 %v623
        %v658 = vunpack.c.h.b16 %v623
        %v659 = vunpack.c.l.b16 %v624
        %v660 = vunpack.c.h.b16 %v624
        %v661 = vunpack.c.l.b16 %v625
        %v662 = vunpack.c.h.b16 %v625
        %v663 = vunpack.c.l.b16 %v626
        %v664 = vunpack.c.h.b16 %v626
        %v665 = vunpack.c.l.b16 %v627
        %v666 = vunpack.c.h.b16 %v627
        %v667 = vunpack.c.l.b16 %v628
        %v668 = vunpack.c.h.b16 %v628
        %v669 = vunpack.c.l.b16 %v629
        %v670 = vunpack.c.h.b16 %v629
        %v671 = vunpack.c.l.b16 %v630
        %v672 = vunpack.c.h.b16 %v630
        %v673 = vunpack.c.l.b16 %v631
        %v674 = vunpack.c.h.b16 %v631
        %v675 = vunpack.c.l.b16 %v632
        %v676 = vunpack.c.h.b16 %v632
        %v677 = vunpack.c.l.b16 %v633
        %v678 = vunpack.c.h.b16 %v633
        %v679 = vunpack.c.l.b16 %v634
        %v680 = vunpack.c.h.b16 %v634
        %v681 = vunpack.c.l.b16 %v635
        %v682 = vunpack.c.h.b16 %v635
        %v683 = vunpack.c.l.b16 %v636
        %v684 = vunpack.c.h.b16 %v636
        %v685 = vpack.c.b16 %v653, %v653
        %v686 = vpack.c.b16 %v654, %v654
        %v687 = vpack.c.b16 %v655, %v655
        %v688 = vpack.c.b16 %v656, %v656
        %v689 = vpack.c.b16 %v657, %v657
        %v690 = vpack.c.b16 %v658, %v658
        %v691 = vpack.c.b16 %v659, %v659
        %v692 = vpack.c.b16 %v660, %v660
        %v693 = vpack.c.b16 %v661, %v661
        %v694 = vpack.c.b16 %v662, %v662
        %v695 = vpack.c.b16 %v663, %v663
        %v696 = vpack.c.b16 %v664, %v664
        %v697 = vpack.c.b16 %v665, %v665
        %v698 = vpack.c.b16 %v666, %v666
        %v699 = vpack.c.b16 %v667, %v667
        %v700 = vpack.c.b16 %v668, %v668
        %v701 = vpack.c.b16 %v669, %v669
        %v702 = vpack.c.b16 %v670, %v670
        %v703 = vpack.c.b16 %v671, %v671
        %v704 = vpack.c.b16 %v672, %v672
        %v705 = vpack.c.b16 %v673, %v673
        %v706 = vpack.c.b16 %v674, %v674
        %v707 = vpack.c.b16 %v675, %v675
        %v708 = vpack.c.b16 %v676, %v676
        %v709 = vpack.c.b16 %v677, %v677
        %v710 = vpack.c.b16 %v678, %v678
        %v711 = vpack.c.b16 %v679, %v679
        %v712 = vpack.c.b16 %v680, %v680
        %v713 = vpack.c.b16 %v681, %v681
        %v714 = vpack.c.b16 %v682, %v682
        %v715 = vpack.c.b16 %v683, %v683
        %v716 = vpack.c.b16 %v684, %v684
        %vm749 = vcmask 519168
        %750 = vst.msk [vmem:[%s223] sm:$0xf] %vm749, %v685
        %751 = vst.msk [vmem:[%s223 + $0x4] sm:$0xf] %vm749, %v686
        %752 = vst.msk [vmem:[%s223 + $0x8] sm:$0xf] %vm749, %v687
        %753 = vst.msk [vmem:[%s223 + $0xc] sm:$0xf] %vm749, %v688
        %754 = vst.msk [vmem:[%s223 + $0x10] sm:$0xf] %vm749, %v689
        %755 = vst.msk [vmem:[%s223 + $0x14] sm:$0xf] %vm749, %v690
        %756 = vst.msk [vmem:[%s223 + $0x18] sm:$0xf] %vm749, %v691
        %757 = vst.msk [vmem:[%s223 + $0x1c] sm:$0xf] %vm749, %v692
        %758 = vst.msk [vmem:[%s223 + $0x20] sm:$0xf] %vm749, %v693
        %759 = vst.msk [vmem:[%s223 + $0x24] sm:$0xf] %vm749, %v694
        %760 = vst.msk [vmem:[%s223 + $0x28] sm:$0xf] %vm749, %v695
        %761 = vst.msk [vmem:[%s223 + $0x2c] sm:$0xf] %vm749, %v696
        %762 = vst.msk [vmem:[%s223 + $0x30] sm:$0xf] %vm749, %v697
        %763 = vst.msk [vmem:[%s223 + $0x34] sm:$0xf] %vm749, %v698
        %764 = vst.msk [vmem:[%s223 + $0x38] sm:$0xf] %vm749, %v699
        %765 = vst.msk [vmem:[%s223 + $0x3c] sm:$0xf] %vm749, %v700
        %766 = vst.msk [vmem:[%s223 + $0x40] sm:$0xf] %vm749, %v701
        %767 = vst.msk [vmem:[%s223 + $0x44] sm:$0xf] %vm749, %v702
        %768 = vst.msk [vmem:[%s223 + $0x48] sm:$0xf] %vm749, %v703
        %769 = vst.msk [vmem:[%s223 + $0x4c] sm:$0xf] %vm749, %v704
        %770 = vst.msk [vmem:[%s223 + $0x50] sm:$0xf] %vm749, %v705
        %771 = vst.msk [vmem:[%s223 + $0x54] sm:$0xf] %vm749, %v706
        %772 = vst.msk [vmem:[%s223 + $0x58] sm:$0xf] %vm749, %v707
        %773 = vst.msk [vmem:[%s223 + $0x5c] sm:$0xf] %vm749, %v708
        %774 = vst.msk [vmem:[%s223 + $0x60] sm:$0xf] %vm749, %v709
        %775 = vst.msk [vmem:[%s223 + $0x64] sm:$0xf] %vm749, %v710
        %776 = vst.msk [vmem:[%s223 + $0x68] sm:$0xf] %vm749, %v711
        %777 = vst.msk [vmem:[%s223 + $0x6c] sm:$0xf] %vm749, %v712
        %778 = vst.msk [vmem:[%s223 + $0x70] sm:$0xf] %vm749, %v713
        %779 = vst.msk [vmem:[%s223 + $0x74] sm:$0xf] %vm749, %v714
        %780 = vst.msk [vmem:[%s223 + $0x78] sm:$0xf] %vm749, %v715
        %781 = vst.msk [vmem:[%s223 + $0x7c] sm:$0xf] %vm749, %v716
        %s782 = sand.u32 %s128, 1
        %s783 = scalar_lea.sflag [#allocation3], %s782
        %s784 = sand.u32 %s128, 1
        %s785 = smul.addr %s784, 128
        %s786 = scalar_lea.vmem [#allocation2], %s785
        // Predicated region
        $region33: #{conv3x3_bn_relu.1} parent=31 // pred_check
          %p787 = pneg %p138
        $region34: #{conv3x3_bn_relu.1} parent=31 // pred_check_branch
          %789 = sbr.rel (%p787) target = $region36
        $region35: #{conv3x3_bn_relu.1} parent=31 // pred_region
          %s790 = smul.u32 16, %s24
          %s792 = ssub.s32 2048, 2048
          %793 = vsyncadd %s783, %s792
          %s794 = smul.addr %s790, 2
          %s795 = sadd.s32 %s22, %s794
          %s796 = smul.addr %s23, 32
          %s797 = sadd.s32 %s795, %s796
          %s798 = smul.addr %s797, 64
          %s799 = scalar_lea.hbm %s3, %s798
          %s800 = sshll.u32 %s786, 4
          %s801 = int_to_ptr.vmem [resolvable:$true] %s800
          %806 = dma.vmem_to_hbm [thread:$0]  %s801, 2048, %s799, %s783, 64, 64, 4
        $region36: #{conv3x3_bn_relu.1} parent=31 // pred_fallthru
          _
      $region32: #{conv3x3_bn_relu.1} parent=5 // pred_fallthru
        _
      %p807 = scmp.le.s32.totalorder 2, %s12
      // Predicated region
      $region37: #{conv3x3_bn_relu.1} parent=5 // pred_check
        %p808 = pneg %p807
      $region38: #{conv3x3_bn_relu.1} parent=5 // pred_check_branch
        %810 = sbr.rel (%p808) target = $region40
      $region39: #{conv3x3_bn_relu.1} parent=5 // pred_region
        %s811 = ssub.s32 %s12, 2
        // Predicated region
        $region41: #{conv3x3_bn_relu.1} parent=39 // pred_check
          %p812 = pneg %p144
        $region42: #{conv3x3_bn_relu.1} parent=39 // pred_check_branch
          %814 = sbr.rel (%p812) target = $region44
        $region43: #{conv3x3_bn_relu.1} parent=39 // pred_region
          %s815 = sand.u32 %s129, 1
          %s816 = scalar_lea.sflag [#allocation3], %s815
          %s817 = sand.u32 %s129, 1
          %s818 = smul.addr %s817, 128
          %s819 = scalar_lea.vmem [#allocation2], %s818
          %820 = dma.done %s816, 2048
        $region44: #{conv3x3_bn_relu.1} parent=39 // pred_fallthru
          _
      $region40: #{conv3x3_bn_relu.1} parent=5 // pred_fallthru
        _
    $region6: #{conv3x3_bn_relu.1} parent=1 // loop_footer
      %s16 = sadd.s32 1, %s12
    $region7: #{conv3x3_bn_relu.1} parent=1 // loop_footer_branch
      %11 = sbr.rel target = $region3
    $region8: #{conv3x3_bn_relu.1} parent=1 // loop_exit
      _
    %821 = vsyncpa [#allocation3], 1
    %s822 = scalar_lea.sflag [#allocation3], 1
    %823 = vsyncpa %s822, 1

</llo_original>
